<compile_context>
chip_gen: v6e
topology: v6e:2x2x1
jax: 0.10.0
libtpu: 0.0.40
codegen_flags: <defaults>
</compile_context>

<pallas_src>
import jax
import jax.numpy as jnp
from jax.experimental import pallas as pl
from jax.experimental.pallas import tpu as pltpu

LANE = 128
SUB = 8


def convout_kernel(params_ref, x_ref, o_ref):
    # params_ref: flat f32 [C + 1] in SMEM: Wf(C) | bf(1)
    # x_ref:      (1, C, R, 128) input tile in VMEM (dense (R,128) per channel)
    # o_ref:      (1, R, 128) dense output tile
    C = x_ref.shape[1]

    # Hoist all scalar (SMEM) reads before any vector work.
    ws = [params_ref[c] for c in range(C)]
    bias = params_ref[C]

    # Folded affine map: C multiply-adds on full (R,128) vreg slabs.
    # TODO(synk): for bf16 inputs on v6e/v7x the multiply-add could stay bf16;
    # we upcast to f32 which is also required on v5e (no bf16 VPU).
    acc = x_ref[0, 0].astype(jnp.float32) * ws[0]
    for c in range(1, C):
        acc = acc + x_ref[0, c].astype(jnp.float32) * ws[c]
    acc = acc + bias

    # Exact sigmoid with a single EUP transcendental.
    o_ref[0] = (0.5 * jnp.tanh(0.5 * acc) + 0.5).astype(o_ref.dtype)


def _pad_and_tile(hw, max_rows=1024):
    """Pick padded pixel count, row count and row tile.

    Returns (hw_pad, rows, row_tile) with hw_pad = rows * 128 and either
    row_tile == rows (full-extent block, always legal) or row_tile a multiple
    of 8 that divides rows.
    """
    hw_pad = pl.cdiv(hw, LANE) * LANE
    rows = hw_pad // LANE
    if rows <= max_rows:
        return hw_pad, rows, rows
    # Multiple tiles needed: pad rows to a multiple of 8 so a legal
    # multiple-of-8 row tile exists, then take the largest one <= max_rows.
    rows = pl.cdiv(rows, SUB) * SUB
    hw_pad = rows * LANE
    t = (max_rows // SUB) * SUB
    while t >= SUB:
        if rows % t == 0:
            return hw_pad, rows, t
        t -= SUB
    return hw_pad, rows, rows  # unreachable: t = 8 always divides rows


def conv_out_pallas(x_nchw, w1, b1, w2, b2, w3, b3, *, max_rows=1024):
    """x_nchw: [B, C, H, W]; w_i are PyTorch Conv2d weights [out, in, 1, 1]."""
    B, C, H, W = x_nchw.shape
    HW = H * W
    hw_pad, rows, row_tile = _pad_and_tile(HW, max_rows)

    # v7x megacore: if the grid would be a single step, split the tile so both
    # TensorCores get work (only when the halves stay 8-row aligned).
    n_tiles = rows // row_tile
    if B == 1 and n_tiles == 1 and rows % (2 * SUB) == 0:
        row_tile = rows // 2
        n_tiles = 2

    # Fold the three 1x1 convs into one affine map (exact: no activation
    # between the convs in this module).
    W1 = w1.reshape(C, C).astype(jnp.float32)
    W2 = w2.reshape(C, C).astype(jnp.float32)
    W3 = w3.reshape(1, C).astype(jnp.float32)
    Wf = W3 @ W2 @ W1                                           # (1, C)
    bf = W3 @ (W2 @ b1.astype(jnp.float32) + b2.astype(jnp.float32)) \
        + b3.astype(jnp.float32)                                # (1,)
    params = jnp.concatenate([Wf.reshape(-1), bf.reshape(-1)])  # (C + 1,)

    # NCHW is already channel-major over contiguous pixels: flatten H*W, pad
    # to the lane/sublane-friendly size, and view pixels as (rows, 128).
    x3 = x_nchw.reshape(B, C, HW)
    if hw_pad != HW:
        x3 = jnp.pad(x3, ((0, 0), (0, 0), (0, hw_pad - HW)))
    x4 = x3.reshape(B, C, rows, LANE)

    grid = (B, n_tiles)

    out3 = pl.pallas_call(
        convout_kernel,
        out_shape=jax.ShapeDtypeStruct((B, rows, LANE), x_nchw.dtype),
        grid_spec=pltpu.PrefetchScalarGridSpec(
            num_scalar_prefetch=0,
            grid=grid,
            in_specs=[
                pl.BlockSpec(memory_space=pltpu.MemorySpace.SMEM),     # params
                pl.BlockSpec((1, C, row_tile, LANE),
                             lambda b, p: (b, 0, p, 0)),               # x tile
            ],
            out_specs=pl.BlockSpec((1, row_tile, LANE),
                                   lambda b, p: (b, p, 0)),
        ),
        compiler_params=pltpu.CompilerParams(
            dimension_semantics=("parallel", "parallel"),
            vmem_limit_bytes=32 * 1024 * 1024),
    )(params, x4)

    out = out3.reshape(B, hw_pad)[:, :HW].reshape(B, 1, H, W)
    return out


def conv_out_ref(x_nchw, w1, b1, w2, b2, w3, b3):
    """Plain-JAX reference: three separate 1x1 convs + sigmoid."""
    B, C, H, W = x_nchw.shape
    x2d = jnp.transpose(x_nchw, (0, 2, 3, 1)).reshape(-1, C).astype(jnp.float32)
    h1 = x2d @ w1.reshape(C, C).T.astype(jnp.float32) + b1
    h2 = h1 @ w2.reshape(C, C).T.astype(jnp.float32) + b2
    h3 = h2 @ w3.reshape(1, C).T.astype(jnp.float32) + b3
    out = jax.nn.sigmoid(h3)
    return jnp.transpose(out.reshape(B, H, W, 1), (0, 3, 1, 2)).astype(x_nchw.dtype)


if __name__ == "__main__":
    key = jax.random.PRNGKey(0)
    B, C, H, W = 2, 4, 16, 16

    kx, k1, k2, k3, kb1, kb2, kb3 = jax.random.split(key, 7)
    x = jax.random.normal(kx, (B, C, H, W), dtype=jnp.float32)

    # PyTorch-style uniform init bounds for kernel_size=1 Conv2d.
    bound = 1.0 / jnp.sqrt(jnp.float32(C))
    w1 = jax.random.uniform(k1, (C, C, 1, 1), jnp.float32, -bound, bound)
    w2 = jax.random.uniform(k2, (C, C, 1, 1), jnp.float32, -bound, bound)
    w3 = jax.random.uniform(k3, (1, C, 1, 1), jnp.float32, -bound, bound)
    b1 = jax.random.uniform(kb1, (C,), jnp.float32, -bound, bound)
    b2 = jax.random.uniform(kb2, (C,), jnp.float32, -bound, bound)
    b3 = jax.random.uniform(kb3, (1,), jnp.float32, -bound, bound)

    out = conv_out_pallas(x, w1, b1, w2, b2, w3, b3)
    out = jax.block_until_ready(out)

    ref = conv_out_ref(x, w1, b1, w2, b2, w3, b3)
    assert out.shape == (B, 1, H, W), out.shape
    # Exact sigmoid (tanh form); only difference vs the reference is the fp
    # rounding order of the folded affine map.
    assert jnp.allclose(out, ref, atol=1e-5, rtol=1e-5), "mismatch vs reference"

    print("KERNEL_OK")
</pallas_src>

<mosaic_0001>
module attributes {stable_mosaic.version = 11 : i64} {
  func.func @convout_kernel(%arg0: i32, %arg1: i32, %arg2: memref<5xf32, #tpu.memory_space<smem>>, %arg3: memref<1x4x2x128xf32, #tpu.memory_space<vmem>>, %arg4: memref<1x2x128xf32, #tpu.memory_space<vmem>>) attributes {dimension_semantics = [#tpu.dimension_semantics<parallel>, #tpu.dimension_semantics<parallel>], iteration_bounds = array<i64: 2, 1>, scalar_prefetch = 0 : i64, scratch_operands = 0 : i64, tpu.core_type = #tpu.core_type<tc>, window_params = [{transform_indices = @transform_0, window_bounds = array<i64: 5>}, {transform_indices = @transform_1, window_bounds = array<i64: 1, 4, 2, 128>}, {transform_indices = @transform_2, window_bounds = array<i64: 1, 2, 128>}]} {
    %c0 = arith.constant 0 : index
    %0 = memref.load %arg2[%c0] : memref<5xf32, #tpu.memory_space<smem>>
    %c1 = arith.constant 1 : index
    %1 = memref.load %arg2[%c1] : memref<5xf32, #tpu.memory_space<smem>>
    %c2 = arith.constant 2 : index
    %2 = memref.load %arg2[%c2] : memref<5xf32, #tpu.memory_space<smem>>
    %c3 = arith.constant 3 : index
    %3 = memref.load %arg2[%c3] : memref<5xf32, #tpu.memory_space<smem>>
    %c4 = arith.constant 4 : index
    %4 = memref.load %arg2[%c4] : memref<5xf32, #tpu.memory_space<smem>>
    %c0_0 = arith.constant 0 : index
    %c0_1 = arith.constant 0 : index
    %c0_2 = arith.constant 0 : index
    %c0_3 = arith.constant 0 : index
    %5 = vector.load %arg3[%c0_0, %c0_1, %c0_2, %c0_3] : memref<1x4x2x128xf32, #tpu.memory_space<vmem>>, vector<1x1x2x128xf32>
    %6 = vector.shape_cast %5 : vector<1x1x2x128xf32> to vector<2x128xf32>
    %7 = vector.broadcast %0 : f32 to vector<2x128xf32>
    %8 = arith.mulf %6, %7 : vector<2x128xf32>
    %c0_4 = arith.constant 0 : index
    %c1_5 = arith.constant 1 : index
    %c0_6 = arith.constant 0 : index
    %c0_7 = arith.constant 0 : index
    %9 = vector.load %arg3[%c0_4, %c1_5, %c0_6, %c0_7] : memref<1x4x2x128xf32, #tpu.memory_space<vmem>>, vector<1x1x2x128xf32>
    %10 = vector.shape_cast %9 : vector<1x1x2x128xf32> to vector<2x128xf32>
    %11 = vector.broadcast %1 : f32 to vector<2x128xf32>
    %12 = arith.mulf %10, %11 : vector<2x128xf32>
    %13 = arith.addf %8, %12 : vector<2x128xf32>
    %c0_8 = arith.constant 0 : index
    %c2_9 = arith.constant 2 : index
    %c0_10 = arith.constant 0 : index
    %c0_11 = arith.constant 0 : index
    %14 = vector.load %arg3[%c0_8, %c2_9, %c0_10, %c0_11] : memref<1x4x2x128xf32, #tpu.memory_space<vmem>>, vector<1x1x2x128xf32>
    %15 = vector.shape_cast %14 : vector<1x1x2x128xf32> to vector<2x128xf32>
    %16 = vector.broadcast %2 : f32 to vector<2x128xf32>
    %17 = arith.mulf %15, %16 : vector<2x128xf32>
    %18 = arith.addf %13, %17 : vector<2x128xf32>
    %c0_12 = arith.constant 0 : index
    %c3_13 = arith.constant 3 : index
    %c0_14 = arith.constant 0 : index
    %c0_15 = arith.constant 0 : index
    %19 = vector.load %arg3[%c0_12, %c3_13, %c0_14, %c0_15] : memref<1x4x2x128xf32, #tpu.memory_space<vmem>>, vector<1x1x2x128xf32>
    %20 = vector.shape_cast %19 : vector<1x1x2x128xf32> to vector<2x128xf32>
    %21 = vector.broadcast %3 : f32 to vector<2x128xf32>
    %22 = arith.mulf %20, %21 : vector<2x128xf32>
    %23 = arith.addf %18, %22 : vector<2x128xf32>
    %24 = vector.broadcast %4 : f32 to vector<2x128xf32>
    %25 = arith.addf %23, %24 : vector<2x128xf32>
    %cst = arith.constant 5.000000e-01 : f32
    %26 = vector.broadcast %cst : f32 to vector<2x128xf32>
    %27 = arith.mulf %26, %25 : vector<2x128xf32>
    %28 = math.tanh %27 : vector<2x128xf32>
    %cst_16 = arith.constant 5.000000e-01 : f32
    %29 = vector.broadcast %cst_16 : f32 to vector<2x128xf32>
    %30 = arith.mulf %29, %28 : vector<2x128xf32>
    %cst_17 = arith.constant 5.000000e-01 : f32
    %31 = vector.broadcast %cst_17 : f32 to vector<2x128xf32>
    %32 = arith.addf %30, %31 : vector<2x128xf32>
    %c0_18 = arith.constant 0 : index
    %c0_19 = arith.constant 0 : index
    %c0_20 = arith.constant 0 : index
    %33 = vector.load %arg4[%c0_18, %c0_19, %c0_20] : memref<1x2x128xf32, #tpu.memory_space<vmem>>, vector<1x2x128xf32>
    %34 = vector.shape_cast %33 : vector<1x2x128xf32> to vector<2x128xf32>
    %35 = vector.shape_cast %32 : vector<2x128xf32> to vector<1x2x128xf32>
    tpu.vector_store %arg4[%c0_18, %c0_19, %c0_20], %35 {strides = array<i32>} : memref<1x2x128xf32, #tpu.memory_space<vmem>>, vector<1x2x128xf32>,
    return
  }
  func.func @transform_0(%arg0: i32, %arg1: i32) -> i32 {
    %c0_i32 = arith.constant 0 : i32
    %c0_i32_0 = arith.constant 0 : i32
    return %c0_i32 : i32
  }
  func.func @transform_1(%arg0: i32, %arg1: i32) -> (i32, i32, i32, i32) {
    %c0_i32 = arith.constant 0 : i32
    %c0_i32_0 = arith.constant 0 : i32
    %c0_i32_1 = arith.constant 0 : i32
    return %arg0, %c0_i32, %arg1, %c0_i32_0 : i32, i32, i32, i32
  }
  func.func @transform_2(%arg0: i32, %arg1: i32) -> (i32, i32, i32) {
    %c0_i32 = arith.constant 0 : i32
    %c0_i32_0 = arith.constant 0 : i32
    return %arg0, %arg1, %c0_i32 : i32, i32, i32
  }
}

</mosaic_0001>

<llo_original>
// kernel: tpu_custom_call.1
$region0: #{tpu_custom_call.1}
  #allocation0 [shape = 'u32[]', space=smem, size = 0x4, offset = 0x4, fixed_abs, tag = 'smem constant byte address 0x4 - core index']
  #allocation1 [shape = 'u32[144,128]{1,0:T(1,128)}', space=vmem, size = 0x12000, scoped, tag = 'internal scratch']
  %s0 = inlined_call_operand.hbm [shape: f32[5], index: 0, kind: input, shape index: {}]
  %s1 = inlined_call_operand.hbm [shape: f32[2,4,2,128], index: 1, kind: input, shape index: {}]
  %s2 = inlined_call_operand.hbm [shape: f32[2,2,128], index: 2, kind: output, shape index: {}]
  %s3 = sld [smem:[#allocation0]]
  $region49: #{tpu_custom_call.1} parent=0
    _
  %s5 = ssub.s32 1, %s3
  %s6 = scalar_select 0, %s5, %s3
  $region1: #{tpu_custom_call.1} parent=0
    #allocation2 [shape = 'u8[512]{0}', space=smem, size = 0x200, scoped, tag = 'input window, operand 0, single buffered']
    #allocation3 [shape = 's32[2]{0}', space=sflag, size = 0x8, scoped, tag = 'scoped memory for tpu_custom_call.1']
    #allocation4 [shape = 's32[2]{0}', space=sflag, size = 0x8, scoped, tag = 'scoped memory for tpu_custom_call.1']
    #allocation5 [shape = 's32[2]{0}', space=sflag, size = 0x8, scoped, tag = 'scoped memory for tpu_custom_call.1']
    #allocation6 [shape = 'u8[8192]{0}', space=vmem, size = 0x2000, scoped, tag = 'input window, operand 1']
    #allocation7 [shape = 'u8[2048]{0}', space=vmem, size = 0x800, scoped, tag = 'output window, operand 0']
    %7 = vsyncpa [#allocation5], 0
    %8 = vsyncpa [#allocation3], 0
    %s9 = scalar_lea.sflag [#allocation3], 1
    %10 = vsyncpa %s9, 0
    %11 = vsyncpa [#allocation4], 0
    %s12 = scalar_lea.sflag [#allocation4], 1
    %13 = vsyncpa %s12, 0
    loop: start=0, step=1, limit=4
    $region2: #{tpu_custom_call.1} parent=1 // loop_pre_header
      _
    $region3: #{tpu_custom_call.1} parent=1 // loop_header
      %s15 = sphi 0, %s19
      %p16 = scmp.ge.s32.totalorder %s15, 4
      %s22 = sphi 0, %s34
      %s23 = sphi 0, %s30
      %s24 = sphi 0, %s22
      %s25 = sphi 0, %s23
      %s26 = sphi 0, %s24
      %s27 = sphi 0, %s25
      %s35 = sphi 0, %s35
      %s37 = sphi 0, %s35
      %s38 = sphi 0, %s37
      %s52 = sphi 0, %s38
      %s60 = sphi 0, %s62
      %s63 = sphi 0, %s60
      %s64 = sphi 0, %s63
      %s80 = sphi 0, %s64
      %s88 = sphi 0, %s90
      %s91 = sphi 0, %s88
      %s92 = sphi 0, %s91
      %s108 = sphi 0, %s92
    $region4: #{tpu_custom_call.1} parent=1 // loop_header_branch
      %18 = sbr.rel (%p16) target = $region8
    $region5: #{tpu_custom_call.1} parent=1 // loop_body
      %s20 = ssub.s32 %s15, 1
      %s21 = ssub.s32 %s15, 2
      %s28 = sadd.s32 1, %s23
      %p29 = scmp.ge.s32.totalorder %s28, 1
      %s30 = scalar_select %p29, 0, %s28
      %s31 = sadd.s32 1, %s22
      %s32 = scalar_select %p29, %s31, %s22
      %p33 = scmp.ge.s32.totalorder %s32, 2
      %s34 = scalar_select %p33, 0, %s32
      %s36 = sadd.s32 %s35, 1
      %p39 = scmp.eq.s32.totalorder %s15, 1
      %p40 = scmp.ne.s32.totalorder %s35, %s37
      %p41 = scmp.eq.s32.totalorder %s15, 0
      %p42 = por %p40, %p41
      %p43 = scmp.ne.s32.totalorder %s35, %s37
      %p44 = scmp.eq.s32.totalorder %s20, 1
      %p45 = por %p43, %p44
      %p46 = scmp.ne.s32.totalorder %s37, %s38
      %p47 = scmp.eq.s32.totalorder %s20, 0
      %p48 = por %p46, %p47
      %p49 = scmp.ne.s32.totalorder %s37, %s38
      %p50 = scmp.eq.s32.totalorder %s21, 1
      %p51 = por %p49, %p50
      %p53 = scmp.ne.s32.totalorder %s38, %s52
      %p54 = scmp.eq.s32.totalorder %s21, 0
      %p55 = por %p53, %p54
      %s56 = ssub.s32 %s22, %s34
      %s57 = ssub.s32 %s23, %s30
      %s58 = sor.u32 %s56, %s57
      %p59 = scmp.eq.s32.totalorder %s58, 0
      %s61 = sadd.s32 %s60, 1
      %s62 = scalar_select %p59, %s60, %s61
      %p65 = pneg %p59
      %p66 = scmp.eq.s32.totalorder %s15, 1
      %p67 = por %p65, %p66
      %p68 = scmp.ne.s32.totalorder %s60, %s63
      %p69 = scmp.eq.s32.totalorder %s15, 0
      %p70 = por %p68, %p69
      %p71 = scmp.ne.s32.totalorder %s60, %s63
      %p72 = scmp.eq.s32.totalorder %s20, 1
      %p73 = por %p71, %p72
      %p74 = scmp.ne.s32.totalorder %s63, %s64
      %p75 = scmp.eq.s32.totalorder %s20, 0
      %p76 = por %p74, %p75
      %p77 = scmp.ne.s32.totalorder %s63, %s64
      %p78 = scmp.eq.s32.totalorder %s21, 1
      %p79 = por %p77, %p78
      %p81 = scmp.ne.s32.totalorder %s64, %s80
      %p82 = scmp.eq.s32.totalorder %s21, 0
      %p83 = por %p81, %p82
      %s84 = ssub.s32 %s22, %s34
      %s85 = ssub.s32 %s23, %s30
      %s86 = sor.u32 %s84, %s85
      %p87 = scmp.eq.s32.totalorder %s86, 0
      %s89 = sadd.s32 %s88, 1
      %s90 = scalar_select %p87, %s88, %s89
      %p93 = pneg %p87
      %p94 = scmp.eq.s32.totalorder %s15, 1
      %p95 = por %p93, %p94
      %p96 = scmp.ne.s32.totalorder %s88, %s91
      %p97 = scmp.eq.s32.totalorder %s15, 0
      %p98 = por %p96, %p97
      %p99 = scmp.ne.s32.totalorder %s88, %s91
      %p100 = scmp.eq.s32.totalorder %s20, 1
      %p101 = por %p99, %p100
      %p102 = scmp.ne.s32.totalorder %s91, %s92
      %p103 = scmp.eq.s32.totalorder %s20, 0
      %p104 = por %p102, %p103
      %p105 = scmp.ne.s32.totalorder %s91, %s92
      %p106 = scmp.eq.s32.totalorder %s21, 1
      %p107 = por %p105, %p106
      %p109 = scmp.ne.s32.totalorder %s92, %s108
      %p110 = scmp.eq.s32.totalorder %s21, 0
      %p111 = por %p109, %p110
      %p112 = scmp.le.s32.totalorder 1, %s15
      %p113 = scmp.lt.s32.totalorder %s15, 3
      %p114 = pnand %p112, %p113
      %p115 = pneg %p114
      // Predicated region
      $region9: #{tpu_custom_call.1} parent=5 // pred_check
        _
      $region10: #{tpu_custom_call.1} parent=5 // pred_check_branch
        %117 = sbr.rel (%p114) target = $region12
      $region11: #{tpu_custom_call.1} parent=5 // pred_region
        %s118 = ssub.s32 %s15, 1
        // Predicated region
        $region13: #{tpu_custom_call.1} parent=11 // pred_check
          %p119 = pneg %p48
        $region14: #{tpu_custom_call.1} parent=11 // pred_check_branch
          %121 = sbr.rel (%p119) target = $region16
        $region15: #{tpu_custom_call.1} parent=11 // pred_region
          %s123 = ssub.s32 16, 16
          %124 = vsyncadd [#allocation5], %s123
          %127 = dma.hbm_to_smem %s0, 16, [#allocation2], [#allocation5]
        $region16: #{tpu_custom_call.1} parent=11 // pred_fallthru
          _
      $region12: #{tpu_custom_call.1} parent=5 // pred_fallthru
        _
      %p128 = scmp.lt.s32.totalorder %s15, 2
      // Predicated region
      $region17: #{tpu_custom_call.1} parent=5 // pred_check
        %p129 = pneg %p128
      $region18: #{tpu_custom_call.1} parent=5 // pred_check_branch
        %131 = sbr.rel (%p129) target = $region20
      $region19: #{tpu_custom_call.1} parent=5 // pred_region
        // Predicated region
        $region21: #{tpu_custom_call.1} parent=19 // pred_check
          %p132 = pneg %p70
        $region22: #{tpu_custom_call.1} parent=19 // pred_check_branch
          %134 = sbr.rel (%p132) target = $region24
        $region23: #{tpu_custom_call.1} parent=19 // pred_region
          %s135 = sand.u32 %s60, 1
          %s136 = scalar_lea.sflag [#allocation3], %s135
          %s137 = sand.u32 %s60, 1
          %s138 = smul.addr %s137, 8
          %s139 = scalar_lea.vmem [#allocation6], %s138
          %s141 = ssub.s32 128, 128
          %142 = vsyncadd %s136, %s141
          %s143 = smul.addr %s22, 4
          %s144 = sadd.s32 %s23, %s143
          %s145 = smul.addr %s144, 32
          %s146 = scalar_lea.hbm %s1, %s145
          %s147 = sshll.u32 %s139, 4
          %s148 = int_to_ptr.vmem [resolvable:$true] %s147
          %153 = dma.hbm_to_vmem [thread:$0]  %s146, 128, %s148, %s136, 32, 32, 2
        $region24: #{tpu_custom_call.1} parent=19 // pred_fallthru
          _
      $region20: #{tpu_custom_call.1} parent=5 // pred_fallthru
        _
      %p154 = scmp.le.s32.totalorder 1, %s15
      %p155 = scmp.lt.s32.totalorder %s15, 3
      %p156 = pnand %p154, %p155
      %p157 = pneg %p156
      // Predicated region
      $region25: #{tpu_custom_call.1} parent=5 // pred_check
        _
      $region26: #{tpu_custom_call.1} parent=5 // pred_check_branch
        %159 = sbr.rel (%p156) target = $region28
      $region27: #{tpu_custom_call.1} parent=5 // pred_region
        %s160 = ssub.s32 %s15, 1
        // Predicated region
        $region29: #{tpu_custom_call.1} parent=27 // pred_check
          %p161 = pneg %p48
        $region30: #{tpu_custom_call.1} parent=27 // pred_check_branch
          %163 = sbr.rel (%p161) target = $region32
        $region31: #{tpu_custom_call.1} parent=27 // pred_region
          %164 = dma.done [#allocation5], 16
        $region32: #{tpu_custom_call.1} parent=27 // pred_fallthru
          _
        %s165 = sand.u32 %s63, 1
        %s166 = scalar_lea.sflag [#allocation3], %s165
        %s167 = sand.u32 %s63, 1
        %s168 = smul.addr %s167, 8
        %s169 = scalar_lea.vmem [#allocation6], %s168
        // Predicated region
        $region33: #{tpu_custom_call.1} parent=27 // pred_check
          %p170 = pneg %p76
        $region34: #{tpu_custom_call.1} parent=27 // pred_check_branch
          %172 = sbr.rel (%p170) target = $region36
        $region35: #{tpu_custom_call.1} parent=27 // pred_region
          %173 = dma.done %s166, 128
        $region36: #{tpu_custom_call.1} parent=27 // pred_fallthru
          _
        %174 = sfence
        %p175 = pneg %p48
        %p176 = pneg %p45
        %s177 = sand.u32 %s63, 1
        %s178 = scalar_lea.sflag [#allocation3], %s177
        %s179 = sand.u32 %s63, 1
        %s180 = smul.addr %s179, 8
        %s181 = scalar_lea.vmem [#allocation6], %s180
        %p182 = pneg %p76
        %p183 = pneg %p73
        %p184 = pneg %p104
        %p185 = pneg %p101
        %s186 = sand.u32 %s91, 1
        %s187 = scalar_lea.sflag [#allocation4], %s186
        %s188 = sand.u32 %s91, 1
        %s189 = smul.addr %s188, 2
        %s190 = scalar_lea.vmem [#allocation7], %s189
        %s191 = sld [smem:[#allocation2]]
        %s192 = sld [smem:[#allocation2 + $0x1]]
        %s193 = sld [smem:[#allocation2 + $0x2]]
        %s194 = sld [smem:[#allocation2 + $0x3]]
        %s195 = sld [smem:[#allocation2 + $0x4]]
        %v196 = vld [vmem:[%s169] sm:$0x3]
        %v197 = vstv %s191
        %v198 = vmul.f32 %v196, %v197
        %s199 = scalar_lea.vmem %s169, 2 [#allocation6]
        %v200 = vld [vmem:[%s199] sm:$0x3]
        %v201 = vstv %s192
        %v202 = vmul.f32 %v200, %v201
        %v203 = vadd.f32 %v198, %v202
        %s204 = scalar_lea.vmem %s169, 4 [#allocation6]
        %v205 = vld [vmem:[%s204] sm:$0x3]
        %v206 = vstv %s193
        %v207 = vmul.f32 %v205, %v206
        %v208 = vadd.f32 %v203, %v207
        %s209 = scalar_lea.vmem %s169, 6 [#allocation6]
        %v210 = vld [vmem:[%s209] sm:$0x3]
        %v211 = vstv %s194
        %v212 = vmul.f32 %v210, %v211
        %v213 = vadd.f32 %v208, %v212
        %v214 = vstv %s195
        %v215 = vadd.f32 %v213, %v214
        %v216 = vmul.f32 %v215, 0.5
        %v217 = vtanh.pop %v216
        %v218 = vmul.f32 %v217, 0.5
        %v219 = vadd.f32 %v218, 0.5
        %220 = vst [vmem:[%s190] sm:$0x3] %v219
        %s221 = sand.u32 %s91, 1
        %s222 = scalar_lea.sflag [#allocation4], %s221
        %s223 = sand.u32 %s91, 1
        %s224 = smul.addr %s223, 2
        %s225 = scalar_lea.vmem [#allocation7], %s224
        // Predicated region
        $region37: #{tpu_custom_call.1} parent=27 // pred_check
          %p226 = pneg %p101
        $region38: #{tpu_custom_call.1} parent=27 // pred_check_branch
          %228 = sbr.rel (%p226) target = $region40
        $region39: #{tpu_custom_call.1} parent=27 // pred_region
          %s230 = ssub.s32 32, 32
          %231 = vsyncadd %s222, %s230
          %s232 = sadd.s32 %s25, %s24
          %s233 = smul.addr %s232, 32
          %s234 = scalar_lea.hbm %s2, %s233
          %s236 = sshll.u32 %s225, 4
          %s237 = int_to_ptr.vmem [resolvable:$true] %s236
          %239 = dma.vmem_to_hbm [thread:$0]  %s237, 32, %s234, %s222
        $region40: #{tpu_custom_call.1} parent=27 // pred_fallthru
          _
      $region28: #{tpu_custom_call.1} parent=5 // pred_fallthru
        _
      %p240 = scmp.le.s32.totalorder 2, %s15
      // Predicated region
      $region41: #{tpu_custom_call.1} parent=5 // pred_check
        %p241 = pneg %p240
      $region42: #{tpu_custom_call.1} parent=5 // pred_check_branch
        %243 = sbr.rel (%p241) target = $region44
      $region43: #{tpu_custom_call.1} parent=5 // pred_region
        %s244 = ssub.s32 %s15, 2
        // Predicated region
        $region45: #{tpu_custom_call.1} parent=43 // pred_check
          %p245 = pneg %p107
        $region46: #{tpu_custom_call.1} parent=43 // pred_check_branch
          %247 = sbr.rel (%p245) target = $region48
        $region47: #{tpu_custom_call.1} parent=43 // pred_region
          %s248 = sand.u32 %s92, 1
          %s249 = scalar_lea.sflag [#allocation4], %s248
          %s250 = sand.u32 %s92, 1
          %s251 = smul.addr %s250, 2
          %s252 = scalar_lea.vmem [#allocation7], %s251
          %253 = dma.done %s249, 32
        $region48: #{tpu_custom_call.1} parent=43 // pred_fallthru
          _
      $region44: #{tpu_custom_call.1} parent=5 // pred_fallthru
        _
    $region6: #{tpu_custom_call.1} parent=1 // loop_footer
      %s19 = sadd.s32 1, %s15
    $region7: #{tpu_custom_call.1} parent=1 // loop_footer_branch
      %14 = sbr.rel target = $region3
    $region8: #{tpu_custom_call.1} parent=1 // loop_exit
      _
    %254 = vsyncpa [#allocation3], 1
    %s255 = scalar_lea.sflag [#allocation3], 1
    %256 = vsyncpa %s255, 1
    %257 = vsyncpa [#allocation4], 1
    %s258 = scalar_lea.sflag [#allocation4], 1
    %259 = vsyncpa %s258, 1
    %260 = vsyncpa [#allocation5], 1
    %s261 = scalar_lea.sflag [#allocation5], 1
    %262 = vsyncpa %s261, 1

</llo_original>
